<compile_context>
chip_gen: v6e
topology: v6e:2x2x1
jax: 0.10.0
libtpu: 0.0.40
codegen_flags: <defaults>
</compile_context>

<pallas_src>
import jax
import jax.numpy as jnp
from jax.experimental import pallas as pl
from jax.experimental.pallas import tpu as pltpu


_DEFAULT_VMEM_CAP = 64 * 2**20      # conservative: v7x physical VMEM per core


def _vmem_capacity_bytes():
    """Generation-aware VMEM capacity (128 MiB on v5e/v6e, 64 MiB on v7x)."""
    try:
        cap = int(pltpu.get_tpu_info().vmem_capacity_bytes)
        if cap > 0:
            return cap
    except Exception:
        pass
    return _DEFAULT_VMEM_CAP


def _tk_candidates(hdim):
    """Descending K-tile candidates: divisors of hdim that are lane-aligned
    (multiple of 128) plus hdim itself (full-extent block is always legal)."""
    cands = {hdim}
    for s in range(1, 129):
        if hdim % s == 0:
            t = hdim // s
            if t % 128 == 0:
                cands.add(t)
    return sorted(cands, reverse=True)


def _plan_tiling(hdim, odim, n_pad, *, tk=None, num_cores=None, vmem_cap=None):
    """Pick (tk, num_cores, n_weight_buffers, vmem_limit_bytes).

    VMEM-budget-driven: the biggest K-tile whose (multi-buffered) bf16 weight
    tiles plus the resident activations/output fit ~75% of the per-core VMEM.
    """
    if vmem_cap is None:
        vmem_cap = _vmem_capacity_bytes()
    budget = int(vmem_cap * 0.75)

    def n_buf_for(steps_per_core):
        # 3-deep weight pipeline only pays off when a core runs >=3 K-steps.
        return 3 if steps_per_core >= 3 else 2

    def bytes_for(t, n_buf):
        weight = n_buf * ((hdim + odim) * t * 2 + 8 * t * 4)   # W1+W2 (bf16) + b1 (f32, 8-row pad)
        resident = (2 * n_pad * hdim * 2                       # x (bf16, default double-buffer)
                    + 2 * n_pad * odim * 4)                    # output slab (f32, default double-buffer)
        return weight + resident

    cands = _tk_candidates(hdim)

    def choose(nc):
        valid = [t for t in cands if (hdim // t) % nc == 0]
        if not valid:
            return None
        for t in valid:                                        # largest tile that fits
            nb = n_buf_for((hdim // t) // nc)
            if bytes_for(t, nb) <= budget:
                return t, nb
        return valid[-1], 2                                    # nothing fits: smallest tile

    if num_cores is None:
        num_cores = 2                                          # harmless serial split on 1-TC parts
    if tk is None:
        picked = choose(num_cores)
        if picked is None:
            num_cores = 1
            picked = choose(1)
        tk, n_buf = picked
    else:
        assert hdim % tk == 0, f"tk={tk} must divide hidden size {hdim}"
        if (hdim // tk) % num_cores != 0:
            num_cores = 1
        n_buf = n_buf_for((hdim // tk) // num_cores)

    need = bytes_for(tk, n_buf)
    vmem_limit = int(min(vmem_cap - (2 << 20),
                         max(int(need * 1.25), 32 * 2**20)))
    return tk, num_cores, n_buf, vmem_limit


def _text_fc_kernel(x_ref, w1_ref, b1_ref, w2_ref, o_ref):
    """o += ReLU(x @ W1[:, tile] + b1[tile]) @ W2[tile, :]  (f32 accumulation).

    Dropout(p=0.0) is the identity and is omitted.  ReLU is elementwise over
    the intermediate hidden dim, so tiling that dim and summing the partial
    second matmuls is exact.  o_ref is the resident accumulator (its block
    index is constant across the reduction axis); b2 is added in the wrapper.
    """
    k = pl.program_id(1)

    @pl.when(k == 0)
    def _():
        o_ref[...] = jnp.zeros(o_ref.shape, o_ref.dtype)

    # bf16 x / bf16 W1 tile on the MXU, f32 accumulation.
    h = jnp.dot(x_ref[...], w1_ref[...], preferred_element_type=jnp.float32)
    h = jnp.maximum(h + b1_ref[...], 0.0)                      # (R, TK), ReLU, f32
    # Keep h in f32 for the second matmul (no extra rounding step); the cast
    # of the W2 tile is free VPU filler in this memory-bound kernel.
    o_ref[...] += jnp.dot(h, w2_ref[...].astype(jnp.float32),
                          preferred_element_type=jnp.float32)


def text_hidden_fc_pallas(seg_hidden, w1_t, b1, w2_t, b2, *,
                          tk=None, num_cores=None, vmem_cap=None):
    """Apply the text_hidden_fcs MLP to gathered seg-token hidden states.

    seg_hidden: (N, H) f32   w1_t: (H, H) bf16   b1: (H,) f32
    w2_t: (H, O) bf16        b2: (O,) f32
    Returns (N, O) f32.
    """
    n, hdim = seg_hidden.shape
    odim = w2_t.shape[1]

    # Pad rows to a multiple of 16 (bf16 sublane packing) for aligned tiles.
    n_pad = max(16, ((n + 15) // 16) * 16)
    tk, num_cores, n_buf, vmem_limit = _plan_tiling(
        hdim, odim, n_pad, tk=tk, num_cores=num_cores, vmem_cap=vmem_cap)
    steps_per_core = (hdim // tk) // num_cores

    # Cast x to bf16 once here (halves its DMA bytes; no per-step VPU cast).
    x = seg_hidden.astype(jnp.bfloat16)
    if n_pad != n:
        # Padded rows produce garbage (ReLU(b1)@W2) and are sliced off below;
        # nothing reduces over rows, so this is safe.
        x = jnp.pad(x, ((0, n_pad - n), (0, 0)))
    b1_2d = b1.reshape(1, hdim).astype(jnp.float32)

    cost = pl.CostEstimate(
        flops=2 * n_pad * hdim * (hdim + odim),
        transcendentals=0,
        bytes_accessed=(hdim * hdim + hdim * odim) * 2 + hdim * 4
        + n_pad * hdim * 2 + num_cores * n_pad * odim * 4,
    )

    def build(use_buffered):
        # Deep (3-buffer) pipelining on the two weight streams when a core runs
        # >=3 K-steps; constant-index operands (x, b1 per-step tiles are tiny)
        # keep the default double-buffering.
        wk = (dict(pipeline_mode=pl.Buffered(n_buf))
              if (use_buffered and n_buf >= 3) else {})
        grid_spec = pltpu.PrefetchScalarGridSpec(
            num_scalar_prefetch=0,
            grid=(num_cores, steps_per_core),
            in_specs=[
                pl.BlockSpec((n_pad, hdim), lambda c, k: (0, 0)),     # x (resident)
                pl.BlockSpec((hdim, tk),
                             lambda c, k: (0, c * steps_per_core + k), **wk),
                pl.BlockSpec((1, tk),
                             lambda c, k: (0, c * steps_per_core + k)),
                pl.BlockSpec((tk, odim),
                             lambda c, k: (c * steps_per_core + k, 0), **wk),
            ],
            # Per-core accumulator slab; block index constant across the
            # reduction axis -> resident in VMEM, written back once per core.
            out_specs=pl.BlockSpec((None, n_pad, odim), lambda c, k: (c, 0, 0)),
        )
        return pl.pallas_call(
            _text_fc_kernel,
            out_shape=jax.ShapeDtypeStruct((num_cores, n_pad, odim), jnp.float32),
            grid_spec=grid_spec,
            compiler_params=pltpu.CompilerParams(
                dimension_semantics=("parallel", "arbitrary"),
                vmem_limit_bytes=vmem_limit,
            ),
            cost_estimate=cost,
        )

    try:
        parts = build(True)(x, w1_t, b1_2d, w2_t)
    except Exception:
        if n_buf < 3:
            raise
        # Fallback if pipeline_mode=Buffered(3) is unavailable on this build.
        parts = build(False)(x, w1_t, b1_2d, w2_t)

    out = parts.sum(axis=0)[:n] + b2.astype(jnp.float32)[None, :]
    return out


def gather_seg_tokens(input_ids, hidden_states, seg_token_idx, max_seg_tokens):
    """Static-shape analogue of `hidden_states[input_ids == seg_token_idx]`.

    Supports a variable number of seg tokens per batch row up to a fixed
    max_seg_tokens budget.  Returns (seg_hidden, valid) where invalid rows
    (fewer seg tokens than the budget) are zeroed and flagged False, in the
    same row-major order torch.nonzero would produce.
    """
    b, s, h = hidden_states.shape
    flat_mask = (input_ids == seg_token_idx).reshape(-1)
    # Stable sort puts seg-token positions first, in original row-major order.
    order = jnp.argsort((~flat_mask).astype(jnp.int32), stable=True)
    idx = order[:max_seg_tokens]
    valid = flat_mask[idx]
    seg_hidden = jnp.take(hidden_states.reshape(b * s, h), idx, axis=0)
    seg_hidden = jnp.where(valid[:, None], seg_hidden, 0.0)
    return seg_hidden, valid


class GemmaLISAForCausalLMPallas:
    """Synthetic-weight stand-in for GemmaLISAForCausalLM's trainable path."""

    def __init__(self, hidden_size, out_dim, seg_token_idx, key):
        k1, k2, k3, k4 = jax.random.split(key, 4)
        # nn.Linear(in,out) stores W as (out, in); pre-transposed for x @ W^T.
        scale1 = 1.0 / jnp.sqrt(hidden_size)
        # Weights streamed as bf16 (memory-bound path); biases kept f32.
        self.w1_t = jax.random.uniform(
            k1, (hidden_size, hidden_size), jnp.float32, -scale1, scale1
        ).astype(jnp.bfloat16)
        self.b1 = jax.random.uniform(k2, (hidden_size,), jnp.float32,
                                     -scale1, scale1)
        self.w2_t = jax.random.uniform(
            k3, (hidden_size, out_dim), jnp.float32, -scale1, scale1
        ).astype(jnp.bfloat16)
        self.b2 = jax.random.uniform(k4, (out_dim,), jnp.float32,
                                     -scale1, scale1)
        self.seg_token_idx = seg_token_idx
        self.hidden_size = hidden_size
        self.out_dim = out_dim

    def forward(self, input_ids, hidden_states, *,
                max_seg_tokens=None, tk=None, num_cores=None):
        """input_ids: (B, S) int32, hidden_states: (B, S, H) float32.

        Mirrors the seg-token branch of GemmaLISAForCausalLM.forward: gather
        hidden states at seg-token positions (up to max_seg_tokens, with a
        validity mask), run text_hidden_fcs, stack along a "num fc heads" axis
        of size 1 (len(text_hidden_fcs) == 1).
        """
        b, s, h = hidden_states.shape
        if max_seg_tokens is None:
            max_seg_tokens = b
        seg_hidden_states, valid = gather_seg_tokens(
            input_ids, hidden_states, self.seg_token_idx, max_seg_tokens)
        # TODO(synk): the gather could be fused into the kernel via scalar
        # prefetch + pl.Element row indexing; kept in the wrapper for clarity.

        sparse = text_hidden_fc_pallas(
            seg_hidden_states, self.w1_t, self.b1, self.w2_t, self.b2,
            tk=tk, num_cores=num_cores)
        sparse = jnp.where(valid[:, None], sparse, 0.0)
        sparse_embeddings = sparse[:, None, :]                     # (N, 1, O)
        # TODO(synk): SAM mask_decoder consumes sparse_embeddings; external.
        return {
            "seg_token_hidden_states": seg_hidden_states,
            "seg_token_valid": valid,
            "sparse_embeddings": sparse_embeddings,
        }


if __name__ == "__main__":
    key = jax.random.PRNGKey(0)
    k1, k2, k3, k4 = jax.random.split(key, 4)
    SEG_TOKEN_IDX = 7
    B, S = 2, 16

    input_ids = jnp.full((B, S), 5, dtype=jnp.int32)
    input_ids = input_ids.at[0, 3].set(SEG_TOKEN_IDX).at[1, 10].set(SEG_TOKEN_IDX)

    # --- Config A: exercises the dual-core split (2 K-steps, 2 output slabs).
    H, O = 256, 256
    model = GemmaLISAForCausalLMPallas(H, O, SEG_TOKEN_IDX, k1)
    hidden_states = jax.random.normal(k2, (B, S, H), jnp.float32)
    out = model.forward(input_ids, hidden_states, tk=128)
    jax.block_until_ready(out["sparse_embeddings"])

    seg_h = out["seg_token_hidden_states"]
    ref = (jnp.maximum(seg_h @ model.w1_t.astype(jnp.float32) + model.b1, 0.0)
           @ model.w2_t.astype(jnp.float32) + model.b2)
    got = out["sparse_embeddings"][:, 0, :]
    assert out["sparse_embeddings"].shape == (B, 1, O)
    assert bool(jnp.all(out["seg_token_valid"]))
    assert jnp.allclose(got, ref, atol=3e-2, rtol=3e-2), (
        float(jnp.max(jnp.abs(got - ref))))

    # --- Config B: exercises the deep (Buffered(3)) weight pipeline
    #               (4 K-steps on a single core) and a non-square MLP.
    H2, O2 = 512, 128
    model2 = GemmaLISAForCausalLMPallas(H2, O2, SEG_TOKEN_IDX, k3)
    hidden_states2 = jax.random.normal(k4, (B, S, H2), jnp.float32)
    out2 = model2.forward(input_ids, hidden_states2, tk=128, num_cores=1)
    jax.block_until_ready(out2["sparse_embeddings"])

    seg_h2 = out2["seg_token_hidden_states"]
    ref2 = (jnp.maximum(seg_h2 @ model2.w1_t.astype(jnp.float32) + model2.b1, 0.0)
            @ model2.w2_t.astype(jnp.float32) + model2.b2)
    got2 = out2["sparse_embeddings"][:, 0, :]
    assert out2["sparse_embeddings"].shape == (B, 1, O2)
    assert jnp.allclose(got2, ref2, atol=3e-2, rtol=3e-2), (
        float(jnp.max(jnp.abs(got2 - ref2))))

    print("KERNEL_OK")
</pallas_src>

<mosaic_0001>
module attributes {stable_mosaic.version = 11 : i64} {
  func.func @_text_fc_kernel(%arg0: i32, %arg1: i32, %arg2: memref<16x256xbf16, #tpu.memory_space<vmem>>, %arg3: memref<256x128xbf16, #tpu.memory_space<vmem>>, %arg4: memref<1x128xf32, #tpu.memory_space<vmem>>, %arg5: memref<128x256xbf16, #tpu.memory_space<vmem>>, %arg6: memref<1x16x256xf32, #tpu.memory_space<vmem>>) attributes {dimension_semantics = [#tpu.dimension_semantics<parallel>, #tpu.dimension_semantics<arbitrary>], iteration_bounds = array<i64: 2, 1>, scalar_prefetch = 0 : i64, scratch_operands = 0 : i64, tpu.core_type = #tpu.core_type<tc>, window_params = [{pipeline_mode = #tpu.pipeline_mode<synchronous>, transform_indices = @transform_0, window_bounds = array<i64: 16, 256>}, {transform_indices = @transform_1, window_bounds = array<i64: 256, 128>}, {transform_indices = @transform_2, window_bounds = array<i64: 1, 128>}, {transform_indices = @transform_3, window_bounds = array<i64: 128, 256>}, {transform_indices = @transform_4, window_bounds = array<i64: 1, 16, 256>}]} {
    %c0_i32 = arith.constant 0 : i32
    %0 = arith.cmpi eq, %arg1, %c0_i32 : i32
    %1 = arith.extui %0 : i1 to i32
    %c0_i32_0 = arith.constant 0 : i32
    %2 = arith.cmpi ne, %1, %c0_i32_0 : i32
    scf.if %2 {
      %cst_16 = arith.constant 0.000000e+00 : f32
      %20 = vector.broadcast %cst_16 : f32 to vector<16x256xf32>
      %c0_17 = arith.constant 0 : index
      %c0_18 = arith.constant 0 : index
      %c0_19 = arith.constant 0 : index
      %21 = vector.load %arg6[%c0_17, %c0_18, %c0_19] : memref<1x16x256xf32, #tpu.memory_space<vmem>>, vector<1x16x256xf32>
      %22 = vector.shape_cast %21 : vector<1x16x256xf32> to vector<16x256xf32>
      %23 = vector.shape_cast %20 : vector<16x256xf32> to vector<1x16x256xf32>
      tpu.vector_store %arg6[%c0_17, %c0_18, %c0_19], %23 {strides = array<i32>} : memref<1x16x256xf32, #tpu.memory_space<vmem>>, vector<1x16x256xf32>,
    } else {
    }
    %c0 = arith.constant 0 : index
    %c0_1 = arith.constant 0 : index
    %3 = vector.load %arg2[%c0, %c0_1] : memref<16x256xbf16, #tpu.memory_space<vmem>>, vector<16x256xbf16>
    %c0_2 = arith.constant 0 : index
    %c0_3 = arith.constant 0 : index
    %4 = vector.load %arg3[%c0_2, %c0_3] : memref<256x128xbf16, #tpu.memory_space<vmem>>, vector<256x128xbf16>
    %cst = arith.constant dense<0.000000e+00> : vector<16x128xf32>
    %5 = tpu.matmul %3, %4, %cst {dimension_numbers = #tpu.dot_dimension_numbers<[1], [0], [0], [1], [0, 0, 1, 1], [], []>} : vector<16x256xbf16>, vector<256x128xbf16>, vector<16x128xf32> -> vector<16x128xf32>
    %c0_4 = arith.constant 0 : index
    %c0_5 = arith.constant 0 : index
    %6 = vector.load %arg4[%c0_4, %c0_5] : memref<1x128xf32, #tpu.memory_space<vmem>>, vector<1x128xf32>
    %7 = vector.broadcast %6 : vector<1x128xf32> to vector<16x128xf32>
    %8 = arith.addf %5, %7 : vector<16x128xf32>
    %cst_6 = arith.constant 0.000000e+00 : f32
    %9 = vector.broadcast %cst_6 : f32 to vector<16x128xf32>
    %10 = arith.maximumf %8, %9 : vector<16x128xf32>
    %c0_7 = arith.constant 0 : index
    %c0_8 = arith.constant 0 : index
    %c0_9 = arith.constant 0 : index
    %11 = vector.load %arg6[%c0_7, %c0_8, %c0_9] : memref<1x16x256xf32, #tpu.memory_space<vmem>>, vector<1x16x256xf32>
    %12 = vector.shape_cast %11 : vector<1x16x256xf32> to vector<16x256xf32>
    %c0_10 = arith.constant 0 : index
    %c0_11 = arith.constant 0 : index
    %13 = vector.load %arg5[%c0_10, %c0_11] : memref<128x256xbf16, #tpu.memory_space<vmem>>, vector<128x256xbf16>
    %14 = arith.extf %13 : vector<128x256xbf16> to vector<128x256xf32>
    %cst_12 = arith.constant dense<0.000000e+00> : vector<16x256xf32>
    %15 = tpu.matmul %10, %14, %cst_12 {dimension_numbers = #tpu.dot_dimension_numbers<[1], [0], [0], [1], [0, 0, 1, 1], [], []>} : vector<16x128xf32>, vector<128x256xf32>, vector<16x256xf32> -> vector<16x256xf32>
    %16 = arith.addf %12, %15 : vector<16x256xf32>
    %c0_13 = arith.constant 0 : index
    %c0_14 = arith.constant 0 : index
    %c0_15 = arith.constant 0 : index
    %17 = vector.load %arg6[%c0_13, %c0_14, %c0_15] : memref<1x16x256xf32, #tpu.memory_space<vmem>>, vector<1x16x256xf32>
    %18 = vector.shape_cast %17 : vector<1x16x256xf32> to vector<16x256xf32>
    %19 = vector.shape_cast %16 : vector<16x256xf32> to vector<1x16x256xf32>
    tpu.vector_store %arg6[%c0_13, %c0_14, %c0_15], %19 {strides = array<i32>} : memref<1x16x256xf32, #tpu.memory_space<vmem>>, vector<1x16x256xf32>,
    return
  }
  func.func @transform_0(%arg0: i32, %arg1: i32) -> (i32, i32) {
    %c0_i32 = arith.constant 0 : i32
    %c0_i32_0 = arith.constant 0 : i32
    %c0_i32_1 = arith.constant 0 : i32
    return %c0_i32, %c0_i32_0 : i32, i32
  }
  func.func @transform_1(%arg0: i32, %arg1: i32) -> (i32, i32) {
    %c1_i32 = arith.constant 1 : i32
    %0 = arith.muli %arg0, %c1_i32 : i32
    %1 = arith.addi %0, %arg1 : i32
    %c0_i32 = arith.constant 0 : i32
    %c0_i32_0 = arith.constant 0 : i32
    return %c0_i32, %1 : i32, i32
  }
  func.func @transform_2(%arg0: i32, %arg1: i32) -> (i32, i32) {
    %c1_i32 = arith.constant 1 : i32
    %0 = arith.muli %arg0, %c1_i32 : i32
    %1 = arith.addi %0, %arg1 : i32
    %c0_i32 = arith.constant 0 : i32
    %c0_i32_0 = arith.constant 0 : i32
    return %c0_i32, %1 : i32, i32
  }
  func.func @transform_3(%arg0: i32, %arg1: i32) -> (i32, i32) {
    %c1_i32 = arith.constant 1 : i32
    %0 = arith.muli %arg0, %c1_i32 : i32
    %1 = arith.addi %0, %arg1 : i32
    %c0_i32 = arith.constant 0 : i32
    %c0_i32_0 = arith.constant 0 : i32
    return %1, %c0_i32 : i32, i32
  }
  func.func @transform_4(%arg0: i32, %arg1: i32) -> (i32, i32, i32) {
    %c0_i32 = arith.constant 0 : i32
    %c0_i32_0 = arith.constant 0 : i32
    %c0_i32_1 = arith.constant 0 : i32
    return %arg0, %c0_i32, %c0_i32_0 : i32, i32, i32
  }
}

</mosaic_0001>

<llo_original>
// kernel: tpu_custom_call.1
$region0: #{tpu_custom_call.1}
  #allocation0 [shape = 'u32[]', space=smem, size = 0x4, offset = 0x4, fixed_abs, tag = 'smem constant byte address 0x4 - core index']
  #allocation1 [shape = 'u32[144,128]{1,0:T(1,128)}', space=vmem, size = 0x12000, scoped, tag = 'internal scratch']
  %s0 = inlined_call_operand.hbm [shape: bf16[16,256], index: 0, kind: input, shape index: {}]
  %s1 = inlined_call_operand.hbm [shape: bf16[256,256], index: 1, kind: input, shape index: {}]
  %s2 = inlined_call_operand.vmem [shape: f32[1,256], index: 2, kind: input, shape index: {}]
  %s3 = inlined_call_operand.hbm [shape: bf16[256,256], index: 3, kind: input, shape index: {}]
  %s4 = inlined_call_operand.hbm [shape: f32[2,16,256], index: 4, kind: output, shape index: {}]
  %s5 = sld [smem:[#allocation0]]
  $region65: #{tpu_custom_call.1} parent=0
    _
  %s7 = ssub.s32 1, %s5
  %s8 = scalar_select 0, %s7, %s5
  $region1: #{tpu_custom_call.1} parent=0
    #allocation2 [shape = 'u8[8192]{0}', space=vmem, size = 0x2000, scoped, tag = 'input window, operand 0, single buffered']
    #allocation3 [shape = 's32[2]{0}', space=sflag, size = 0x8, scoped, tag = 'scoped memory for tpu_custom_call.1']
    #allocation4 [shape = 's32[2]{0}', space=sflag, size = 0x8, scoped, tag = 'scoped memory for tpu_custom_call.1']
    #allocation5 [shape = 'u8[131072]{0}', space=vmem, size = 0x20000, scoped, tag = 'input window, operand 1']
    #allocation6 [shape = 's32[2]{0}', space=sflag, size = 0x8, scoped, tag = 'scoped memory for tpu_custom_call.1']
    #allocation7 [shape = 'u8[131072]{0}', space=vmem, size = 0x20000, scoped, tag = 'input window, operand 3']
    #allocation8 [shape = 'u8[32768]{0}', space=vmem, size = 0x8000, scoped, tag = 'output window, operand 0']
    %9 = vsyncpa [#allocation3], 0
    %10 = vsyncpa [#allocation6], 0
    %s11 = scalar_lea.sflag [#allocation6], 1
    %12 = vsyncpa %s11, 0
    %13 = vsyncpa [#allocation4], 0
    %s14 = scalar_lea.sflag [#allocation4], 1
    %15 = vsyncpa %s14, 0
    loop: start=0, step=1, limit=4
    $region2: #{tpu_custom_call.1} parent=1 // loop_pre_header
      _
    $region3: #{tpu_custom_call.1} parent=1 // loop_header
      %s17 = sphi 0, %s21
      %p18 = scmp.ge.s32.totalorder %s17, 4
      %s24 = sphi 0, %s36
      %s25 = sphi 0, %s32
      %s26 = sphi 0, %s24
      %s27 = sphi 0, %s25
      %s28 = sphi 0, %s26
      %s29 = sphi 0, %s27
      %s37 = sphi 0, %s37
      %s39 = sphi 0, %s37
      %s40 = sphi 0, %s39
      %s54 = sphi 0, %s40
      %s62 = sphi 0, %s64
      %s65 = sphi 0, %s62
      %s66 = sphi 0, %s65
      %s82 = sphi 0, %s66
      %s90 = sphi 0, %s92
      %s93 = sphi 0, %s90
      %s94 = sphi 0, %s93
      %s110 = sphi 0, %s94
      %s118 = sphi 0, %s120
      %s121 = sphi 0, %s118
      %s122 = sphi 0, %s121
      %s138 = sphi 0, %s122
      %s144 = sphi 0, %s146
      %s147 = sphi 0, %s144
      %s148 = sphi 0, %s147
      %s164 = sphi 0, %s148
    $region4: #{tpu_custom_call.1} parent=1 // loop_header_branch
      %20 = sbr.rel (%p18) target = $region8
    $region5: #{tpu_custom_call.1} parent=1 // loop_body
      %s22 = ssub.s32 %s17, 1
      %s23 = ssub.s32 %s17, 2
      %s30 = sadd.s32 1, %s25
      %p31 = scmp.ge.s32.totalorder %s30, 1
      %s32 = scalar_select %p31, 0, %s30
      %s33 = sadd.s32 1, %s24
      %s34 = scalar_select %p31, %s33, %s24
      %p35 = scmp.ge.s32.totalorder %s34, 2
      %s36 = scalar_select %p35, 0, %s34
      %s38 = sadd.s32 %s37, 1
      %p41 = scmp.eq.s32.totalorder %s17, 1
      %p42 = scmp.ne.s32.totalorder %s37, %s39
      %p43 = scmp.eq.s32.totalorder %s17, 0
      %p44 = por %p42, %p43
      %p45 = scmp.ne.s32.totalorder %s37, %s39
      %p46 = scmp.eq.s32.totalorder %s22, 1
      %p47 = por %p45, %p46
      %p48 = scmp.ne.s32.totalorder %s39, %s40
      %p49 = scmp.eq.s32.totalorder %s22, 0
      %p50 = por %p48, %p49
      %p51 = scmp.ne.s32.totalorder %s39, %s40
      %p52 = scmp.eq.s32.totalorder %s23, 1
      %p53 = por %p51, %p52
      %p55 = scmp.ne.s32.totalorder %s40, %s54
      %p56 = scmp.eq.s32.totalorder %s23, 0
      %p57 = por %p55, %p56
      %s58 = sadd.s32 %s24, %s25
      %s59 = sadd.s32 %s36, %s32
      %s60 = ssub.s32 %s58, %s59
      %p61 = scmp.eq.s32.totalorder %s60, 0
      %s63 = sadd.s32 %s62, 1
      %s64 = scalar_select %p61, %s62, %s63
      %p67 = pneg %p61
      %p68 = scmp.eq.s32.totalorder %s17, 1
      %p69 = por %p67, %p68
      %p70 = scmp.ne.s32.totalorder %s62, %s65
      %p71 = scmp.eq.s32.totalorder %s17, 0
      %p72 = por %p70, %p71
      %p73 = scmp.ne.s32.totalorder %s62, %s65
      %p74 = scmp.eq.s32.totalorder %s22, 1
      %p75 = por %p73, %p74
      %p76 = scmp.ne.s32.totalorder %s65, %s66
      %p77 = scmp.eq.s32.totalorder %s22, 0
      %p78 = por %p76, %p77
      %p79 = scmp.ne.s32.totalorder %s65, %s66
      %p80 = scmp.eq.s32.totalorder %s23, 1
      %p81 = por %p79, %p80
      %p83 = scmp.ne.s32.totalorder %s66, %s82
      %p84 = scmp.eq.s32.totalorder %s23, 0
      %p85 = por %p83, %p84
      %s86 = sadd.s32 %s24, %s25
      %s87 = sadd.s32 %s36, %s32
      %s88 = ssub.s32 %s86, %s87
      %p89 = scmp.eq.s32.totalorder %s88, 0
      %s91 = sadd.s32 %s90, 1
      %s92 = scalar_select %p89, %s90, %s91
      %p95 = pneg %p89
      %p96 = scmp.eq.s32.totalorder %s17, 1
      %p97 = por %p95, %p96
      %p98 = scmp.ne.s32.totalorder %s90, %s93
      %p99 = scmp.eq.s32.totalorder %s17, 0
      %p100 = por %p98, %p99
      %p101 = scmp.ne.s32.totalorder %s90, %s93
      %p102 = scmp.eq.s32.totalorder %s22, 1
      %p103 = por %p101, %p102
      %p104 = scmp.ne.s32.totalorder %s93, %s94
      %p105 = scmp.eq.s32.totalorder %s22, 0
      %p106 = por %p104, %p105
      %p107 = scmp.ne.s32.totalorder %s93, %s94
      %p108 = scmp.eq.s32.totalorder %s23, 1
      %p109 = por %p107, %p108
      %p111 = scmp.ne.s32.totalorder %s94, %s110
      %p112 = scmp.eq.s32.totalorder %s23, 0
      %p113 = por %p111, %p112
      %s114 = sadd.s32 %s24, %s25
      %s115 = sadd.s32 %s36, %s32
      %s116 = ssub.s32 %s114, %s115
      %p117 = scmp.eq.s32.totalorder %s116, 0
      %s119 = sadd.s32 %s118, 1
      %s120 = scalar_select %p117, %s118, %s119
      %p123 = pneg %p117
      %p124 = scmp.eq.s32.totalorder %s17, 1
      %p125 = por %p123, %p124
      %p126 = scmp.ne.s32.totalorder %s118, %s121
      %p127 = scmp.eq.s32.totalorder %s17, 0
      %p128 = por %p126, %p127
      %p129 = scmp.ne.s32.totalorder %s118, %s121
      %p130 = scmp.eq.s32.totalorder %s22, 1
      %p131 = por %p129, %p130
      %p132 = scmp.ne.s32.totalorder %s121, %s122
      %p133 = scmp.eq.s32.totalorder %s22, 0
      %p134 = por %p132, %p133
      %p135 = scmp.ne.s32.totalorder %s121, %s122
      %p136 = scmp.eq.s32.totalorder %s23, 1
      %p137 = por %p135, %p136
      %p139 = scmp.ne.s32.totalorder %s122, %s138
      %p140 = scmp.eq.s32.totalorder %s23, 0
      %p141 = por %p139, %p140
      %s142 = ssub.s32 %s24, %s36
      %p143 = scmp.eq.s32.totalorder %s142, 0
      %s145 = sadd.s32 %s144, 1
      %s146 = scalar_select %p143, %s144, %s145
      %p149 = pneg %p143
      %p150 = scmp.eq.s32.totalorder %s17, 1
      %p151 = por %p149, %p150
      %p152 = scmp.ne.s32.totalorder %s144, %s147
      %p153 = scmp.eq.s32.totalorder %s17, 0
      %p154 = por %p152, %p153
      %p155 = scmp.ne.s32.totalorder %s144, %s147
      %p156 = scmp.eq.s32.totalorder %s22, 1
      %p157 = por %p155, %p156
      %p158 = scmp.ne.s32.totalorder %s147, %s148
      %p159 = scmp.eq.s32.totalorder %s22, 0
      %p160 = por %p158, %p159
      %p161 = scmp.ne.s32.totalorder %s147, %s148
      %p162 = scmp.eq.s32.totalorder %s23, 1
      %p163 = por %p161, %p162
      %p165 = scmp.ne.s32.totalorder %s148, %s164
      %p166 = scmp.eq.s32.totalorder %s23, 0
      %p167 = por %p165, %p166
      %p168 = scmp.le.s32.totalorder 1, %s17
      %p169 = scmp.lt.s32.totalorder %s17, 3
      %p170 = pnand %p168, %p169
      %p171 = pneg %p170
      // Predicated region
      $region9: #{tpu_custom_call.1} parent=5 // pred_check
        _
      $region10: #{tpu_custom_call.1} parent=5 // pred_check_branch
        %173 = sbr.rel (%p170) target = $region12
      $region11: #{tpu_custom_call.1} parent=5 // pred_region
        %s174 = ssub.s32 %s17, 1
        // Predicated region
        $region13: #{tpu_custom_call.1} parent=11 // pred_check
          %p175 = pneg %p50
        $region14: #{tpu_custom_call.1} parent=11 // pred_check_branch
          %177 = sbr.rel (%p175) target = $region16
        $region15: #{tpu_custom_call.1} parent=11 // pred_region
          %s179 = ssub.s32 256, 256
          %180 = vsyncadd [#allocation3], %s179
          %s181 = sshll.u32 [#allocation2], 4
          %s182 = int_to_ptr.vmem [resolvable:$true] %s181
          %187 = dma.hbm_to_vmem [thread:$0]  %s0, 256, %s182, [#allocation3], 128, 128, 8
        $region16: #{tpu_custom_call.1} parent=11 // pred_fallthru
          _
      $region12: #{tpu_custom_call.1} parent=5 // pred_fallthru
        _
      %p188 = scmp.lt.s32.totalorder %s17, 2
      // Predicated region
      $region17: #{tpu_custom_call.1} parent=5 // pred_check
        %p189 = pneg %p188
      $region18: #{tpu_custom_call.1} parent=5 // pred_check_branch
        %191 = sbr.rel (%p189) target = $region20
      $region19: #{tpu_custom_call.1} parent=5 // pred_region
        // Predicated region
        $region21: #{tpu_custom_call.1} parent=19 // pred_check
          %p192 = pneg %p72
        $region22: #{tpu_custom_call.1} parent=19 // pred_check_branch
          %194 = sbr.rel (%p192) target = $region24
        $region23: #{tpu_custom_call.1} parent=19 // pred_region
          %s195 = sand.u32 %s17, 1
          %s196 = scalar_lea.sflag [#allocation6], %s195
          %s197 = sand.u32 %s62, 1
          %s198 = smul.addr %s197, 128
          %s199 = scalar_lea.vmem [#allocation5], %s198
          %s200 = sadd.s32 %s24, %s25
          %s202 = ssub.s32 2048, 2048
          %203 = vsyncadd %s196, %s202
          %s204 = smul.addr %s200, 64
          %s205 = scalar_lea.hbm %s1, %s204
          %s206 = sshll.u32 %s199, 4
          %s207 = int_to_ptr.vmem [resolvable:$true] %s206
          %212 = dma.hbm_to_vmem [thread:$0]  %s205, 2048, %s207, %s196, 128, 64, 4
        $region24: #{tpu_custom_call.1} parent=19 // pred_fallthru
          _
        // Predicated region
        $region25: #{tpu_custom_call.1} parent=19 // pred_check
          %p213 = pneg %p100
        $region26: #{tpu_custom_call.1} parent=19 // pred_check_branch
          %215 = sbr.rel (%p213) target = $region28
        $region27: #{tpu_custom_call.1} parent=19 // pred_region
          %s216 = sadd.s32 %s24, %s25
          %p217 = scmp.lt.s32.totalorder %s216, 1
          %s218 = scalar_select %p217, %s216, 1
          %s219 = scalar_lea.vmem %s2, %s218
          %s220 = sadd.s32 %s24, %s25
        $region28: #{tpu_custom_call.1} parent=19 // pred_fallthru
          _
        // Predicated region
        $region29: #{tpu_custom_call.1} parent=19 // pred_check
          %p221 = pneg %p128
        $region30: #{tpu_custom_call.1} parent=19 // pred_check_branch
          %223 = sbr.rel (%p221) target = $region32
        $region31: #{tpu_custom_call.1} parent=19 // pred_region
          %s224 = sand.u32 %s17, 1
          %s225 = scalar_lea.sflag [#allocation6], %s224
          %s226 = sand.u32 %s118, 1
          %s227 = smul.addr %s226, 128
          %s228 = scalar_lea.vmem [#allocation7], %s227
          %s229 = sadd.s32 %s24, %s25
          %s230 = smul.u32 16, %s229
          %s232 = ssub.s32 2048, 2048
          %233 = vsyncadd %s225, %s232
          %s234 = smul.addr %s230, 2
          %s235 = smul.addr %s234, 64
          %s236 = scalar_lea.hbm %s3, %s235
          %s237 = sshll.u32 %s228, 4
          %s238 = int_to_ptr.vmem [resolvable:$true] %s237
          %243 = dma.hbm_to_vmem [thread:$0]  %s236, 2048, %s238, %s225, 128, 128, 8
        $region32: #{tpu_custom_call.1} parent=19 // pred_fallthru
          _
      $region20: #{tpu_custom_call.1} parent=5 // pred_fallthru
        _
      %p244 = scmp.le.s32.totalorder 1, %s17
      %p245 = scmp.lt.s32.totalorder %s17, 3
      %p246 = pnand %p244, %p245
      %p247 = pneg %p246
      // Predicated region
      $region33: #{tpu_custom_call.1} parent=5 // pred_check
        _
      $region34: #{tpu_custom_call.1} parent=5 // pred_check_branch
        %249 = sbr.rel (%p246) target = $region36
      $region35: #{tpu_custom_call.1} parent=5 // pred_region
        %s250 = ssub.s32 %s17, 1
        // Predicated region
        $region37: #{tpu_custom_call.1} parent=35 // pred_check
          %p251 = pneg %p50
        $region38: #{tpu_custom_call.1} parent=35 // pred_check_branch
          %253 = sbr.rel (%p251) target = $region40
        $region39: #{tpu_custom_call.1} parent=35 // pred_region
          %254 = dma.done [#allocation3], 256
        $region40: #{tpu_custom_call.1} parent=35 // pred_fallthru
          _
        %s255 = sand.u32 %s22, 1
        %s256 = scalar_lea.sflag [#allocation6], %s255
        %s257 = sand.u32 %s65, 1
        %s258 = smul.addr %s257, 128
        %s259 = scalar_lea.vmem [#allocation5], %s258
        // Predicated region
        $region41: #{tpu_custom_call.1} parent=35 // pred_check
          %p260 = pneg %p78
        $region42: #{tpu_custom_call.1} parent=35 // pred_check_branch
          %262 = sbr.rel (%p260) target = $region44
        $region43: #{tpu_custom_call.1} parent=35 // pred_region
          %263 = dma.done %s256, 2048
        $region44: #{tpu_custom_call.1} parent=35 // pred_fallthru
          _
        %s264 = sand.u32 %s22, 1
        %s265 = scalar_lea.sflag [#allocation6], %s264
        %s266 = sand.u32 %s121, 1
        %s267 = smul.addr %s266, 128
        %s268 = scalar_lea.vmem [#allocation7], %s267
        // Predicated region
        $region45: #{tpu_custom_call.1} parent=35 // pred_check
          %p269 = pneg %p134
        $region46: #{tpu_custom_call.1} parent=35 // pred_check_branch
          %271 = sbr.rel (%p269) target = $region48
        $region47: #{tpu_custom_call.1} parent=35 // pred_region
          %272 = dma.done %s265, 2048
        $region48: #{tpu_custom_call.1} parent=35 // pred_fallthru
          _
        %p273 = pneg %p50
        %p274 = pneg %p47
        %s275 = sand.u32 %s22, 1
        %s276 = scalar_lea.sflag [#allocation6], %s275
        %s277 = sand.u32 %s65, 1
        %s278 = smul.addr %s277, 128
        %s279 = scalar_lea.vmem [#allocation5], %s278
        %p280 = pneg %p78
        %p281 = pneg %p75
        %s282 = sadd.s32 %s26, %s27
        %p283 = scmp.lt.s32.totalorder %s282, 1
        %s284 = scalar_select %p283, %s282, 1
        %s285 = scalar_lea.vmem %s2, %s284
        %p286 = pneg %p106
        %p287 = pneg %p103
        %s288 = sand.u32 %s22, 1
        %s289 = scalar_lea.sflag [#allocation6], %s288
        %s290 = sand.u32 %s121, 1
        %s291 = smul.addr %s290, 128
        %s292 = scalar_lea.vmem [#allocation7], %s291
        %p293 = pneg %p134
        %p294 = pneg %p131
        %p295 = pneg %p160
        %p296 = pneg %p157
        %s297 = sand.u32 %s147, 1
        %s298 = scalar_lea.sflag [#allocation4], %s297
        %s299 = sand.u32 %s147, 1
        %s300 = smul.addr %s299, 32
        %s301 = scalar_lea.vmem [#allocation8], %s300
        %s302 = sadd.s32 %s26, %s27
        %s303 = sadd.s32 %s26, %s27
        %p304 = scmp.lt.s32.totalorder %s303, 1
        %s305 = scalar_select %p304, %s303, 1
        %s306 = scalar_lea.vmem %s2, %s305
        %s307 = sadd.s32 %s26, %s27
        %s308 = sadd.s32 %s26, %s27
        %s309 = smul.u32 16, %s308
        %p311 = scmp.eq.s32.totalorder %s27, 0
        // Predicated region
        $region49: #{tpu_custom_call.1} parent=35 // pred_check
          %p312 = pneg %p311
        $region50: #{tpu_custom_call.1} parent=35 // pred_check_branch
          %314 = sbr.rel (%p312) target = $region52
        $region51: #{tpu_custom_call.1} parent=35 // pred_region
          %315 = vst [vmem:[%s301] sm:$0xff] 0.0
          %316 = vst [vmem:[%s301 + $0x8] sm:$0xff] 0.0
          %317 = vst [vmem:[%s301 + $0x10] sm:$0xff] 0.0
          %318 = vst [vmem:[%s301 + $0x18] sm:$0xff] 0.0
        $region52: #{tpu_custom_call.1} parent=35 // pred_fallthru
          _
        %v319 = vld [vmem:[#allocation2] sm:$0xff]
        %v320 = vld [vmem:[#allocation2 + $0x8] sm:$0xff]
        %v321 = vld [vmem:[%s259] sm:$0xf]
        %v322 = vld [vmem:[%s259 + $0x4] sm:$0xf]
        %v323 = vld [vmem:[%s259 + $0x8] sm:$0xf]
        %v324 = vld [vmem:[%s259 + $0xc] sm:$0xf]
        %v325 = vld [vmem:[%s259 + $0x10] sm:$0xf]
        %v326 = vld [vmem:[%s259 + $0x14] sm:$0xf]
        %v327 = vld [vmem:[%s259 + $0x18] sm:$0xf]
        %v328 = vld [vmem:[%s259 + $0x1c] sm:$0xf]
        %v329 = vld [vmem:[%s259 + $0x20] sm:$0xf]
        %v330 = vld [vmem:[%s259 + $0x24] sm:$0xf]
        %v331 = vld [vmem:[%s259 + $0x28] sm:$0xf]
        %v332 = vld [vmem:[%s259 + $0x2c] sm:$0xf]
        %v333 = vld [vmem:[%s259 + $0x30] sm:$0xf]
        %v334 = vld [vmem:[%s259 + $0x34] sm:$0xf]
        %v335 = vld [vmem:[%s259 + $0x38] sm:$0xf]
        %v336 = vld [vmem:[%s259 + $0x3c] sm:$0xf]
        %v337 = vld [vmem:[%s259 + $0x40] sm:$0xf]
        %v338 = vld [vmem:[%s259 + $0x44] sm:$0xf]
        %v339 = vld [vmem:[%s259 + $0x48] sm:$0xf]
        %v340 = vld [vmem:[%s259 + $0x4c] sm:$0xf]
        %v341 = vld [vmem:[%s259 + $0x50] sm:$0xf]
        %v342 = vld [vmem:[%s259 + $0x54] sm:$0xf]
        %v343 = vld [vmem:[%s259 + $0x58] sm:$0xf]
        %v344 = vld [vmem:[%s259 + $0x5c] sm:$0xf]
        %v345 = vld [vmem:[%s259 + $0x60] sm:$0xf]
        %v346 = vld [vmem:[%s259 + $0x64] sm:$0xf]
        %v347 = vld [vmem:[%s259 + $0x68] sm:$0xf]
        %v348 = vld [vmem:[%s259 + $0x6c] sm:$0xf]
        %v349 = vld [vmem:[%s259 + $0x70] sm:$0xf]
        %v350 = vld [vmem:[%s259 + $0x74] sm:$0xf]
        %v351 = vld [vmem:[%s259 + $0x78] sm:$0xf]
        %v352 = vld [vmem:[%s259 + $0x7c] sm:$0xf]
        %v353 = vld [vmem:[%s306] sm:$0x1]
        %v355 = vlaneseq
        %v356 = vshrl.u32 %v355, 7
        %v357 = vsub.s32 0, %v356
        %v358 = vrot.slane %v353, %v357
        %v362 = vunpack.c.l.b16 %v319
        %v363 = vunpack.c.h.b16 %v319
        %v364 = vunpack.c.l.b16 %v320
        %v365 = vunpack.c.h.b16 %v320
        %v366 = vpack.c.b16 %v364, %v362
        %v367 = vpack.c.b16 %v365, %v363
        %v402 = vunpack.c.l.b16 %v321
        %v403 = vunpack.c.l.b16 %v322
        %v404 = vunpack.c.l.b16 %v323
        %v405 = vunpack.c.l.b16 %v324
        %v406 = vunpack.c.l.b16 %v325
        %v407 = vunpack.c.l.b16 %v326
        %v408 = vunpack.c.l.b16 %v327
        %v409 = vunpack.c.l.b16 %v328
        %v410 = vunpack.c.l.b16 %v329
        %v411 = vunpack.c.l.b16 %v330
        %v412 = vunpack.c.l.b16 %v331
        %v413 = vunpack.c.l.b16 %v332
        %v414 = vunpack.c.l.b16 %v333
        %v415 = vunpack.c.l.b16 %v334
        %v416 = vunpack.c.l.b16 %v335
        %v417 = vunpack.c.l.b16 %v336
        %v418 = vunpack.c.l.b16 %v337
        %v419 = vunpack.c.l.b16 %v338
        %v420 = vunpack.c.l.b16 %v339
        %v421 = vunpack.c.l.b16 %v340
        %v422 = vunpack.c.l.b16 %v341
        %v423 = vunpack.c.l.b16 %v342
        %v424 = vunpack.c.l.b16 %v343
        %v425 = vunpack.c.l.b16 %v344
        %v426 = vunpack.c.l.b16 %v345
        %v427 = vunpack.c.l.b16 %v346
        %v428 = vunpack.c.l.b16 %v347
        %v429 = vunpack.c.l.b16 %v348
        %v430 = vunpack.c.l.b16 %v349
        %v431 = vunpack.c.l.b16 %v350
        %v432 = vunpack.c.l.b16 %v351
        %v433 = vunpack.c.l.b16 %v352
        %v434 = vpack.c.b16 %v403, %v402
        %v435 = vpack.c.b16 %v405, %v404
        %v436 = vpack.c.b16 %v407, %v406
        %v437 = vpack.c.b16 %v409, %v408
        %v438 = vpack.c.b16 %v411, %v410
        %v439 = vpack.c.b16 %v413, %v412
        %v440 = vpack.c.b16 %v415, %v414
        %v441 = vpack.c.b16 %v417, %v416
        %v442 = vpack.c.b16 %v419, %v418
        %v443 = vpack.c.b16 %v421, %v420
        %v444 = vpack.c.b16 %v423, %v422
        %v445 = vpack.c.b16 %v425, %v424
        %v446 = vpack.c.b16 %v427, %v426
        %v447 = vpack.c.b16 %v429, %v428
        %v448 = vpack.c.b16 %v431, %v430
        %v449 = vpack.c.b16 %v433, %v432
        %466 = vmatprep.subr.bf16.mxu0 0
        %467 = vmatpush1.bf16.msra.mxu0 %v441
        %468 = vmatprep.subr.bf16.mxu0 0
        %469 = vmatpush1.bf16.msra.mxu0 %v440
        %470 = vmatprep.subr.bf16.mxu0 0
        %471 = vmatpush1.bf16.msra.mxu0 %v439
        %472 = vmatprep.subr.bf16.mxu0 0
        %473 = vmatpush1.bf16.msra.mxu0 %v438
        %474 = vmatprep.subr.bf16.mxu0 0
        %475 = vmatpush1.bf16.msra.mxu0 %v437
        %476 = vmatprep.subr.bf16.mxu0 0
        %477 = vmatpush1.bf16.msra.mxu0 %v436
        %478 = vmatprep.subr.bf16.mxu0 0
        %479 = vmatpush1.bf16.msra.mxu0 %v435
        %480 = vmatprep.subr.bf16.mxu0 0
        %481 = vmatpush1.bf16.msra.mxu0 %v434
        %482 = vmatprep.subr.bf16.mxu0 0
        %483 = vmatpush2.bf16.msra.mxu0 %v449
        %484 = vmatprep.subr.bf16.mxu0 0
        %485 = vmatpush2.bf16.msra.mxu0 %v448
        %486 = vmatprep.subr.bf16.mxu0 0
        %487 = vmatpush2.bf16.msra.mxu0 %v447
        %488 = vmatprep.subr.bf16.mxu0 0
        %489 = vmatpush2.bf16.msra.mxu0 %v446
        %490 = vmatprep.subr.bf16.mxu0 0
        %491 = vmatpush2.bf16.msra.mxu0 %v445
        %492 = vmatprep.subr.bf16.mxu0 0
        %493 = vmatpush2.bf16.msra.mxu0 %v444
        %494 = vmatprep.subr.bf16.mxu0 0
        %495 = vmatpush2.bf16.msra.mxu0 %v443
        %496 = vmatprep.subr.bf16.mxu0 0
        %497 = vmatpush2.bf16.msra.mxu0 %v442
        %498 = vmatprep.mubr.bf16.mxu0 %v367
        %499 = vmatmul.mubr.bf16.gmra.mxu0 %v366
        %v500 = vpop.f32.mrf.mxu0
        %v501 = vadd.f32 %v358, %v500
        %v502 = vpop.f32.mrf.mxu0
        %v503 = vpop.f32.mrf.mxu0
        %v504 = vadd.f32 %v358, %v503
        %v505 = vpop.f32.mrf.mxu0
        %506 = vdwg.mxu0
        %v507 = vmax.f32 %v501, 0.0
        %v508 = vmax.f32 %v504, 0.0
        %v509 = vld [vmem:[%s301] sm:$0xff]
        %v510 = vld [vmem:[%s301 + $0x8] sm:$0xff]
        %v511 = vld [vmem:[%s301 + $0x10] sm:$0xff]
        %v512 = vld [vmem:[%s301 + $0x18] sm:$0xff]
        %v513 = vld [vmem:[%s268] sm:$0xff]
        %v514 = vld [vmem:[%s268 + $0x8] sm:$0xff]
        %v515 = vld [vmem:[%s268 + $0x10] sm:$0xff]
        %v516 = vld [vmem:[%s268 + $0x18] sm:$0xff]
        %v517 = vld [vmem:[%s268 + $0x20] sm:$0xff]
        %v518 = vld [vmem:[%s268 + $0x28] sm:$0xff]
        %v519 = vld [vmem:[%s268 + $0x30] sm:$0xff]
        %v520 = vld [vmem:[%s268 + $0x38] sm:$0xff]
        %v521 = vld [vmem:[%s268 + $0x40] sm:$0xff]
        %v522 = vld [vmem:[%s268 + $0x48] sm:$0xff]
        %v523 = vld [vmem:[%s268 + $0x50] sm:$0xff]
        %v524 = vld [vmem:[%s268 + $0x58] sm:$0xff]
        %v525 = vld [vmem:[%s268 + $0x60] sm:$0xff]
        %v526 = vld [vmem:[%s268 + $0x68] sm:$0xff]
        %v527 = vld [vmem:[%s268 + $0x70] sm:$0xff]
        %v528 = vld [vmem:[%s268 + $0x78] sm:$0xff]
        %v529 = vunpack.c.l.bf16 %v513
        %v530 = vunpack.c.h.bf16 %v513
        %v531 = vunpack.c.l.bf16 %v514
        %v532 = vunpack.c.h.bf16 %v514
        %v533 = vunpack.c.l.bf16 %v515
        %v534 = vunpack.c.h.bf16 %v515
        %v535 = vunpack.c.l.bf16 %v516
        %v536 = vunpack.c.h.bf16 %v516
        %v537 = vunpack.c.l.bf16 %v517
        %v538 = vunpack.c.h.bf16 %v517
        %v539 = vunpack.c.l.bf16 %v518
        %v540 = vunpack.c.h.bf16 %v518
        %v541 = vunpack.c.l.bf16 %v519
        %v542 = vunpack.c.h.bf16 %v519
        %v543 = vunpack.c.l.bf16 %v520
        %v544 = vunpack.c.h.bf16 %v520
        %v545 = vunpack.c.l.bf16 %v521
        %v546 = vunpack.c.h.bf16 %v521
        %v547 = vunpack.c.l.bf16 %v522
        %v548 = vunpack.c.h.bf16 %v522
        %v549 = vunpack.c.l.bf16 %v523
        %v550 = vunpack.c.h.bf16 %v523
        %v551 = vunpack.c.l.bf16 %v524
        %v552 = vunpack.c.h.bf16 %v524
        %v553 = vunpack.c.l.bf16 %v525
        %v554 = vunpack.c.h.bf16 %v525
        %v555 = vunpack.c.l.bf16 %v526
        %v556 = vunpack.c.h.bf16 %v526
        %v557 = vunpack.c.l.bf16 %v527
        %v558 = vunpack.c.h.bf16 %v527
        %v559 = vunpack.c.l.bf16 %v528
        %v560 = vunpack.c.h.bf16 %v528
        %561 = vmatprep.subr.mxu0 %v560
        %562 = vmatpush1.msra.mxu0 %v559
        %563 = vmatprep.subr.mxu0 %v558
        %564 = vmatpush1.msra.mxu0 %v557
        %565 = vmatprep.subr.mxu0 %v556
        %566 = vmatpush1.msra.mxu0 %v555
        %567 = vmatprep.subr.mxu0 %v554
        %568 = vmatpush1.msra.mxu0 %v553
        %569 = vmatprep.subr.mxu0 %v552
        %570 = vmatpush1.msra.mxu0 %v551
        %571 = vmatprep.subr.mxu0 %v550
        %572 = vmatpush1.msra.mxu0 %v549
        %573 = vmatprep.subr.mxu0 %v548
        %574 = vmatpush1.msra.mxu0 %v547
        %575 = vmatprep.subr.mxu0 %v546
        %576 = vmatpush1.msra.mxu0 %v545
        %577 = vmatprep.subr.mxu0 %v544
        %578 = vmatpush1.msra.mxu0 %v543
        %579 = vmatprep.subr.mxu0 %v542
        %580 = vmatpush1.msra.mxu0 %v541
        %581 = vmatprep.subr.mxu0 %v540
        %582 = vmatpush1.msra.mxu0 %v539
        %583 = vmatprep.subr.mxu0 %v538
        %584 = vmatpush1.msra.mxu0 %v537
        %585 = vmatprep.subr.mxu0 %v536
        %586 = vmatpush1.msra.mxu0 %v535
        %587 = vmatprep.subr.mxu0 %v534
        %588 = vmatpush1.msra.mxu0 %v533
        %589 = vmatprep.subr.mxu0 %v532
        %590 = vmatpush1.msra.mxu0 %v531
        %591 = vmatprep.subr.mxu0 %v530
        %592 = vmatpush1.msra.mxu0 %v529
        %593 = vmatprep.subr.mxu0 0.0
        %594 = vmatpush2.msra.mxu0 0.0
        %595 = vmatprep.subr.mxu0 0.0
        %596 = vmatpush2.msra.mxu0 0.0
        %597 = vmatprep.subr.mxu0 0.0
        %598 = vmatpush2.msra.mxu0 0.0
        %599 = vmatprep.subr.mxu0 0.0
        %600 = vmatpush2.msra.mxu0 0.0
        %601 = vmatprep.subr.mxu0 0.0
        %602 = vmatpush2.msra.mxu0 0.0
        %603 = vmatprep.subr.mxu0 0.0
        %604 = vmatpush2.msra.mxu0 0.0
        %605 = vmatprep.subr.mxu0 0.0
        %606 = vmatpush2.msra.mxu0 0.0
        %607 = vmatprep.subr.mxu0 0.0
        %608 = vmatpush2.msra.mxu0 0.0
        %609 = vmatprep.subr.mxu0 0.0
        %610 = vmatpush2.msra.mxu0 0.0
        %611 = vmatprep.subr.mxu0 0.0
        %612 = vmatpush2.msra.mxu0 0.0
        %613 = vmatprep.subr.mxu0 0.0
        %614 = vmatpush2.msra.mxu0 0.0
        %615 = vmatprep.subr.mxu0 0.0
        %616 = vmatpush2.msra.mxu0 0.0
        %617 = vmatprep.subr.mxu0 0.0
        %618 = vmatpush2.msra.mxu0 0.0
        %619 = vmatprep.subr.mxu0 0.0
        %620 = vmatpush2.msra.mxu0 0.0
        %621 = vmatprep.subr.mxu0 0.0
        %622 = vmatpush2.msra.mxu0 0.0
        %623 = vmatprep.subr.mxu0 0.0
        %624 = vmatpush2.msra.mxu0 0.0
        %625 = vmatprep.mubr.f32.mxu0 0.0
        %626 = vmatmul.mubr.f32.gmra.mxu0 %v507
        %v627 = vpop.f32.mrf.mxu0
        %v628 = vadd.f32 0.0, %v627
        %v629 = vpop.f32.mrf.mxu0
        %v630 = vadd.f32 0.0, %v629
        %631 = vmatprep.mubr.f32.mxu0 0.0
        %632 = vmatmul.mubr.f32.gmra.mxu0 %v508
        %v633 = vpop.f32.mrf.mxu0
        %v634 = vadd.f32 0.0, %v633
        %v635 = vpop.f32.mrf.mxu0
        %v636 = vadd.f32 0.0, %v635
        %637 = vdwg.mxu0
        %v638 = vadd.f32 %v509, %v628
        %v639 = vadd.f32 %v510, %v630
        %v640 = vadd.f32 %v511, %v634
        %v641 = vadd.f32 %v512, %v636
        %642 = vst [vmem:[%s301] sm:$0xff] %v638
        %643 = vst [vmem:[%s301 + $0x8] sm:$0xff] %v639
        %644 = vst [vmem:[%s301 + $0x10] sm:$0xff] %v640
        %645 = vst [vmem:[%s301 + $0x18] sm:$0xff] %v641
        %s646 = sand.u32 %s147, 1
        %s647 = scalar_lea.sflag [#allocation4], %s646
        %s648 = sand.u32 %s147, 1
        %s649 = smul.addr %s648, 32
        %s650 = scalar_lea.vmem [#allocation8], %s649
        // Predicated region
        $region53: #{tpu_custom_call.1} parent=35 // pred_check
          %p651 = pneg %p157
        $region54: #{tpu_custom_call.1} parent=35 // pred_check_branch
          %653 = sbr.rel (%p651) target = $region56
        $region55: #{tpu_custom_call.1} parent=35 // pred_region
          %s655 = ssub.s32 512, 512
          %656 = vsyncadd %s647, %s655
          %s657 = smul.addr %s26, 4
          %s658 = smul.addr %s657, 128
          %s659 = scalar_lea.hbm %s4, %s658
          %s660 = sshll.u32 %s650, 4
          %s661 = int_to_ptr.vmem [resolvable:$true] %s660
          %666 = dma.vmem_to_hbm [thread:$0]  %s661, 512, %s659, %s647, 256, 256, 16
        $region56: #{tpu_custom_call.1} parent=35 // pred_fallthru
          _
      $region36: #{tpu_custom_call.1} parent=5 // pred_fallthru
        _
      %p667 = scmp.le.s32.totalorder 2, %s17
      // Predicated region
      $region57: #{tpu_custom_call.1} parent=5 // pred_check
        %p668 = pneg %p667
      $region58: #{tpu_custom_call.1} parent=5 // pred_check_branch
        %670 = sbr.rel (%p668) target = $region60
      $region59: #{tpu_custom_call.1} parent=5 // pred_region
        %s671 = ssub.s32 %s17, 2
        // Predicated region
        $region61: #{tpu_custom_call.1} parent=59 // pred_check
          %p672 = pneg %p163
        $region62: #{tpu_custom_call.1} parent=59 // pred_check_branch
          %674 = sbr.rel (%p672) target = $region64
        $region63: #{tpu_custom_call.1} parent=59 // pred_region
          %s675 = sand.u32 %s148, 1
          %s676 = scalar_lea.sflag [#allocation4], %s675
          %s677 = sand.u32 %s148, 1
          %s678 = smul.addr %s677, 32
          %s679 = scalar_lea.vmem [#allocation8], %s678
          %680 = dma.done %s676, 512
        $region64: #{tpu_custom_call.1} parent=59 // pred_fallthru
          _
      $region60: #{tpu_custom_call.1} parent=5 // pred_fallthru
        _
    $region6: #{tpu_custom_call.1} parent=1 // loop_footer
      %s21 = sadd.s32 1, %s17
    $region7: #{tpu_custom_call.1} parent=1 // loop_footer_branch
      %16 = sbr.rel target = $region3
    $region8: #{tpu_custom_call.1} parent=1 // loop_exit
      _
    %681 = vsyncpa [#allocation3], 1
    %s682 = scalar_lea.sflag [#allocation3], 1
    %683 = vsyncpa %s682, 1
    %684 = vsyncpa [#allocation6], 1
    %s685 = scalar_lea.sflag [#allocation6], 1
    %686 = vsyncpa %s685, 1
    %687 = vsyncpa [#allocation4], 1
    %s688 = scalar_lea.sflag [#allocation4], 1
    %689 = vsyncpa %s688, 1

</llo_original>
